<compile_context>
chip_gen: v5e
topology: v5e:2x2
jax: 0.10.0
libtpu: 0.0.40
codegen_flags: <defaults>
</compile_context>

<pallas_src>
import functools

import jax
import jax.numpy as jnp
from jax.experimental import pallas as pl
from jax.experimental.pallas import tpu as pltpu


def _rotary_kernel(pos_ref, theta_ref, cos_ref, sin_ref, *, half_dim):
    # pos_ref:   (tS, 1)       float32  -- positions for this (batch, seq-tile)
    # theta_ref: (1, dim//2)   float32  -- resident, same block every step
    # cos_ref:   (tS, dim)     out dtype
    # sin_ref:   (tS, dim)     out dtype
    freqs = pos_ref[...] * theta_ref[...]          # (tS,1)*(1,D2) -> (tS, D2)
    c = jnp.cos(freqs).astype(cos_ref.dtype)
    s = jnp.sin(freqs).astype(sin_ref.dtype)
    # emb = concat(freqs, freqs): duplicate the half-width result into both
    # output halves instead of running cos/sin over a (tS, dim) tensor.
    if half_dim % 128 == 0:
        # Lane-aligned halves -> two unmasked slice stores.
        cos_ref[:, :half_dim] = c
        cos_ref[:, half_dim:] = c
        sin_ref[:, :half_dim] = s
        sin_ref[:, half_dim:] = s
    else:
        # Small head_dim: one lane-shift (concat) + a single full-tile store
        # beats two lane-offset masked stores.
        cos_ref[...] = jnp.concatenate([c, c], axis=-1)
        sin_ref[...] = jnp.concatenate([s, s], axis=-1)


def _pick_seq_tile(S, out_dtype):
    """Seq tile: multiple of the sublane quantum for out_dtype."""
    itemsize = jnp.dtype(out_dtype).itemsize
    min_sub = {4: 8, 2: 16, 1: 32}.get(itemsize, 8)
    if S <= 1024:
        return S  # a full-extent block is always layout-legal
    # Prefer a large tile that divides S exactly (no masked ragged tail).
    for t in (1024, 2048, 512, 256):
        if t % min_sub == 0 and S % t == 0:
            return t
    # Irregular long S: fixed large tile, Pallas masks the last partial block.
    return 1024


def gemma_rotary_embedding(x, position_ids, dim, base=10000.0, seq_tile=None):
    """Returns (cos, sin), each (batch, seq_len, dim) with dtype of x."""
    assert dim % 2 == 0, "head_dim must be even for rotary embeddings"
    B, S = position_ids.shape
    D2 = dim // 2
    out_dtype = x.dtype
    out_itemsize = jnp.dtype(out_dtype).itemsize

    # Theta buffer, built exactly like the PyTorch __init__ (float32).
    theta = 1.0 / (base ** (jnp.arange(0, dim, 2, dtype=jnp.float32) / dim))
    theta = theta.reshape(1, D2)

    # Note: float32 positions lose integer precision beyond 2^24; this matches
    # the PyTorch float path and is irrelevant for realistic context lengths.
    pos = position_ids.astype(jnp.float32)[:, :, None]     # (B, S, 1)

    tS = seq_tile if seq_tile is not None else _pick_seq_tile(S, out_dtype)
    grid = (B, pl.cdiv(S, tS))

    kernel = functools.partial(_rotary_kernel, half_dim=D2)
    out_shape = (
        jax.ShapeDtypeStruct((B, S, dim), out_dtype),
        jax.ShapeDtypeStruct((B, S, dim), out_dtype),
    )

    cost = pl.CostEstimate(
        flops=B * S * D2,                       # the pos * theta multiplies
        transcendentals=2 * B * S * D2,         # half-width cos + sin
        bytes_accessed=B * S * 4 + D2 * 4 + 2 * B * S * dim * out_itemsize,
    )

    cos, sin = pl.pallas_call(
        kernel,
        out_shape=out_shape,
        grid_spec=pltpu.PrefetchScalarGridSpec(
            num_scalar_prefetch=0,
            grid=grid,
            in_specs=[
                # positions: batch dim squeezed, seq on sublanes, 1 lane
                pl.BlockSpec((None, tS, 1), lambda b, s: (b, s, 0)),
                # theta: replicated (same block index every step -> resident)
                pl.BlockSpec((1, D2), lambda b, s: (0, 0)),
            ],
            out_specs=[
                pl.BlockSpec((None, tS, dim), lambda b, s: (b, s, 0)),
                pl.BlockSpec((None, tS, dim), lambda b, s: (b, s, 0)),
            ],
        ),
        compiler_params=pltpu.CompilerParams(
            dimension_semantics=("parallel", "parallel"),
        ),
        cost_estimate=cost,
    )(pos, theta)
    return cos, sin


def _reference(x, position_ids, dim, base=10000.0):
    """Pure-JAX reference mirroring the PyTorch forward."""
    theta = 1.0 / (base ** (jnp.arange(0, dim, 2, dtype=jnp.float32) / dim))
    freqs = position_ids.astype(jnp.float32)[:, :, None] * theta[None, None, :]
    emb = jnp.concatenate([freqs, freqs], axis=-1)
    return jnp.cos(emb).astype(x.dtype), jnp.sin(emb).astype(x.dtype)


if __name__ == "__main__":
    key = jax.random.PRNGKey(0)
    kx, kp, kq = jax.random.split(key, 3)

    # --- primary small test (matches the module's expected layout) ---------
    batch, num_heads, seq_len, head_dim = 2, 4, 8, 32
    x = jax.random.normal(kx, (batch, num_heads, seq_len, head_dim),
                          dtype=jnp.float32)
    position_ids = jnp.broadcast_to(
        jnp.arange(seq_len, dtype=jnp.int32)[None, :], (batch, seq_len)
    )

    cos, sin = gemma_rotary_embedding(x, position_ids, dim=head_dim)
    jax.block_until_ready((cos, sin))

    cos_ref, sin_ref = _reference(x, position_ids, dim=head_dim)
    assert cos.shape == (batch, seq_len, head_dim)
    assert sin.shape == (batch, seq_len, head_dim)
    assert cos.dtype == x.dtype and sin.dtype == x.dtype
    assert jnp.allclose(cos, cos_ref, atol=1e-5, rtol=1e-5)
    assert jnp.allclose(sin, sin_ref, atol=1e-5, rtol=1e-5)

    # --- test 2: exercises seq tiling (grid=(B, S//tS)) and bf16 ------------
    b2, s2, d2 = 2, 2048, 64
    x2 = jax.random.normal(kp, (b2, 2, s2, d2), dtype=jnp.bfloat16)
    pos2 = jnp.broadcast_to(jnp.arange(s2, dtype=jnp.int32)[None, :], (b2, s2))

    cos2, sin2 = gemma_rotary_embedding(x2, pos2, dim=d2)
    jax.block_until_ready((cos2, sin2))

    cos2_ref, sin2_ref = _reference(x2, pos2, dim=d2)
    assert cos2.shape == (b2, s2, d2) and cos2.dtype == jnp.bfloat16
    assert jnp.allclose(cos2.astype(jnp.float32), cos2_ref.astype(jnp.float32),
                        atol=2e-2, rtol=2e-2)
    assert jnp.allclose(sin2.astype(jnp.float32), sin2_ref.astype(jnp.float32),
                        atol=2e-2, rtol=2e-2)

    # --- test 3: ragged S (masked tail), Gemma-like head_dim=256 (aligned
    #     slice-store path), non-trivial position_ids -----------------------
    b3, s3, d3 = 1, 1200, 256
    x3 = jax.random.normal(kq, (b3, 2, s3, d3), dtype=jnp.bfloat16)
    pos3 = jax.random.randint(kq, (b3, s3), minval=0, maxval=8192,
                              dtype=jnp.int32)

    cos3, sin3 = gemma_rotary_embedding(x3, pos3, dim=d3)
    jax.block_until_ready((cos3, sin3))

    cos3_ref, sin3_ref = _reference(x3, pos3, dim=d3)
    assert cos3.shape == (b3, s3, d3) and cos3.dtype == jnp.bfloat16
    assert jnp.allclose(cos3.astype(jnp.float32), cos3_ref.astype(jnp.float32),
                        atol=2e-2, rtol=2e-2)
    assert jnp.allclose(sin3.astype(jnp.float32), sin3_ref.astype(jnp.float32),
                        atol=2e-2, rtol=2e-2)

    print("KERNEL_OK")
</pallas_src>

<mosaic_0001>
module attributes {stable_mosaic.version = 11 : i64} {
  func.func @_rotary_kernel(%arg0: i32, %arg1: i32, %arg2: memref<1x8x1xf32, #tpu.memory_space<vmem>>, %arg3: memref<1x16xf32, #tpu.memory_space<vmem>>, %arg4: memref<1x8x32xf32, #tpu.memory_space<vmem>>, %arg5: memref<1x8x32xf32, #tpu.memory_space<vmem>>) attributes {dimension_semantics = [#tpu.dimension_semantics<parallel>, #tpu.dimension_semantics<parallel>], iteration_bounds = array<i64: 2, 1>, scalar_prefetch = 0 : i64, scratch_operands = 0 : i64, tpu.core_type = #tpu.core_type<tc>, window_params = [{transform_indices = @transform_0, window_bounds = array<i64: 1, 8, 1>}, {pipeline_mode = #tpu.pipeline_mode<synchronous>, transform_indices = @transform_1, window_bounds = array<i64: 1, 16>}, {transform_indices = @transform_2, window_bounds = array<i64: 1, 8, 32>}, {transform_indices = @transform_3, window_bounds = array<i64: 1, 8, 32>}]} {
    %c0 = arith.constant 0 : index
    %c0_0 = arith.constant 0 : index
    %c0_1 = arith.constant 0 : index
    %0 = vector.load %arg2[%c0, %c0_0, %c0_1] : memref<1x8x1xf32, #tpu.memory_space<vmem>>, vector<1x8x1xf32>
    %1 = vector.shape_cast %0 : vector<1x8x1xf32> to vector<8x1xf32>
    %c0_2 = arith.constant 0 : index
    %c0_3 = arith.constant 0 : index
    %2 = vector.load %arg3[%c0_2, %c0_3] : memref<1x16xf32, #tpu.memory_space<vmem>>, vector<1x16xf32>
    %3 = vector.broadcast %1 : vector<8x1xf32> to vector<8x16xf32>
    %4 = vector.broadcast %2 : vector<1x16xf32> to vector<8x16xf32>
    %5 = arith.mulf %3, %4 : vector<8x16xf32>
    %6 = math.cos %5 : vector<8x16xf32>
    %7 = math.sin %5 : vector<8x16xf32>
    %8 = tpu.concatenate %6, %6 in 1 : vector<8x16xf32>, vector<8x16xf32> -> vector<8x32xf32>
    %c0_4 = arith.constant 0 : index
    %c0_5 = arith.constant 0 : index
    %c0_6 = arith.constant 0 : index
    %9 = vector.load %arg4[%c0_4, %c0_5, %c0_6] : memref<1x8x32xf32, #tpu.memory_space<vmem>>, vector<1x8x32xf32>
    %10 = vector.shape_cast %9 : vector<1x8x32xf32> to vector<8x32xf32>
    %11 = vector.shape_cast %8 : vector<8x32xf32> to vector<1x8x32xf32>
    tpu.vector_store %arg4[%c0_4, %c0_5, %c0_6], %11 {strides = array<i32>} : memref<1x8x32xf32, #tpu.memory_space<vmem>>, vector<1x8x32xf32>,
    %12 = tpu.concatenate %7, %7 in 1 : vector<8x16xf32>, vector<8x16xf32> -> vector<8x32xf32>
    %c0_7 = arith.constant 0 : index
    %c0_8 = arith.constant 0 : index
    %c0_9 = arith.constant 0 : index
    %13 = vector.load %arg5[%c0_7, %c0_8, %c0_9] : memref<1x8x32xf32, #tpu.memory_space<vmem>>, vector<1x8x32xf32>
    %14 = vector.shape_cast %13 : vector<1x8x32xf32> to vector<8x32xf32>
    %15 = vector.shape_cast %12 : vector<8x32xf32> to vector<1x8x32xf32>
    tpu.vector_store %arg5[%c0_7, %c0_8, %c0_9], %15 {strides = array<i32>} : memref<1x8x32xf32, #tpu.memory_space<vmem>>, vector<1x8x32xf32>,
    return
  }
  func.func @transform_0(%arg0: i32, %arg1: i32) -> (i32, i32, i32) {
    %c0_i32 = arith.constant 0 : i32
    %c0_i32_0 = arith.constant 0 : i32
    return %arg0, %arg1, %c0_i32 : i32, i32, i32
  }
  func.func @transform_1(%arg0: i32, %arg1: i32) -> (i32, i32) {
    %c0_i32 = arith.constant 0 : i32
    %c0_i32_0 = arith.constant 0 : i32
    %c0_i32_1 = arith.constant 0 : i32
    return %c0_i32, %c0_i32_0 : i32, i32
  }
  func.func @transform_2(%arg0: i32, %arg1: i32) -> (i32, i32, i32) {
    %c0_i32 = arith.constant 0 : i32
    %c0_i32_0 = arith.constant 0 : i32
    return %arg0, %arg1, %c0_i32 : i32, i32, i32
  }
  func.func @transform_3(%arg0: i32, %arg1: i32) -> (i32, i32, i32) {
    %c0_i32 = arith.constant 0 : i32
    %c0_i32_0 = arith.constant 0 : i32
    return %arg0, %arg1, %c0_i32 : i32, i32, i32
  }
}

</mosaic_0001>

<llo_original>
// kernel: tpu_custom_call.1
$region0: #{tpu_custom_call.1}
  #allocation0 [shape = 'u32[]', space=smem, size = 0x4, offset = 0x4, fixed_abs, tag = 'smem constant byte address 0x4 - core index']
  #allocation1 [shape = 'u32[72,128]{1,0:T(1,128)}', space=vmem, size = 0x9000, scoped, tag = 'internal scratch']
  %s0 = inlined_call_operand.vmem [shape: f32[2,8,1], index: 0, kind: input, shape index: {}]
  %s1 = inlined_call_operand.vmem [shape: f32[1,16], index: 1, kind: input, shape index: {}]
  %s2 = inlined_call_operand.hbm [shape: f32[2,8,32], index: 2, kind: output, shape index: {0}]
  %s3 = inlined_call_operand.hbm [shape: f32[2,8,32], index: 3, kind: output, shape index: {1}]
  %4 = xla_tuple %s2, %s3
  %s5 = sld [smem:[#allocation0]]
  $region49: #{tpu_custom_call.1} parent=0
    _
  %s7 = ssub.s32 1, %s5
  %s8 = scalar_select 0, %s7, %s5
  $region1: #{tpu_custom_call.1} parent=0
    #allocation2 [shape = 'u8[8192]{0}', space=vmem, size = 0x2000, scoped, tag = 'output window, operand 0']
    #allocation3 [shape = 's32[2]{0}', space=sflag, size = 0x8, scoped, tag = 'scoped memory for tpu_custom_call.1']
    #allocation4 [shape = 'u8[8192]{0}', space=vmem, size = 0x2000, scoped, tag = 'output window, operand 1']
    #allocation5 [shape = 's32[2]{0}', space=sflag, size = 0x8, scoped, tag = 'scoped memory for tpu_custom_call.1']
    %9 = vsyncpa [#allocation3], 0
    %s10 = scalar_lea.sflag [#allocation3], 1
    %11 = vsyncpa %s10, 0
    %12 = vsyncpa [#allocation5], 0
    %s13 = scalar_lea.sflag [#allocation5], 1
    %14 = vsyncpa %s13, 0
    loop: start=0, step=1, limit=4
    $region2: #{tpu_custom_call.1} parent=1 // loop_pre_header
      _
    $region3: #{tpu_custom_call.1} parent=1 // loop_header
      %s16 = sphi 0, %s20
      %p17 = scmp.ge.s32.totalorder %s16, 4
      %s23 = sphi 0, %s35
      %s24 = sphi 0, %s31
      %s25 = sphi 0, %s23
      %s26 = sphi 0, %s24
      %s27 = sphi 0, %s25
      %s28 = sphi 0, %s26
      %s40 = sphi 0, %s42
      %s43 = sphi 0, %s40
      %s44 = sphi 0, %s43
      %s60 = sphi 0, %s44
      %s64 = sphi 0, %s64
      %s66 = sphi 0, %s64
      %s67 = sphi 0, %s66
      %s81 = sphi 0, %s67
      %s89 = sphi 0, %s91
      %s92 = sphi 0, %s89
      %s93 = sphi 0, %s92
      %s109 = sphi 0, %s93
      %s117 = sphi 0, %s119
      %s120 = sphi 0, %s117
      %s121 = sphi 0, %s120
      %s137 = sphi 0, %s121
    $region4: #{tpu_custom_call.1} parent=1 // loop_header_branch
      %19 = sbr.rel (%p17) target = $region8
    $region5: #{tpu_custom_call.1} parent=1 // loop_body
      %s21 = ssub.s32 %s16, 1
      %s22 = ssub.s32 %s16, 2
      %s29 = sadd.s32 1, %s24
      %p30 = scmp.ge.s32.totalorder %s29, 1
      %s31 = scalar_select %p30, 0, %s29
      %s32 = sadd.s32 1, %s23
      %s33 = scalar_select %p30, %s32, %s23
      %p34 = scmp.ge.s32.totalorder %s33, 2
      %s35 = scalar_select %p34, 0, %s33
      %s36 = ssub.s32 %s23, %s35
      %s37 = ssub.s32 %s24, %s31
      %s38 = sor.u32 %s36, %s37
      %p39 = scmp.eq.s32.totalorder %s38, 0
      %s41 = sadd.s32 %s40, 1
      %s42 = scalar_select %p39, %s40, %s41
      %p45 = pneg %p39
      %p46 = scmp.eq.s32.totalorder %s16, 1
      %p47 = por %p45, %p46
      %p48 = scmp.ne.s32.totalorder %s40, %s43
      %p49 = scmp.eq.s32.totalorder %s16, 0
      %p50 = por %p48, %p49
      %p51 = scmp.ne.s32.totalorder %s40, %s43
      %p52 = scmp.eq.s32.totalorder %s21, 1
      %p53 = por %p51, %p52
      %p54 = scmp.ne.s32.totalorder %s43, %s44
      %p55 = scmp.eq.s32.totalorder %s21, 0
      %p56 = por %p54, %p55
      %p57 = scmp.ne.s32.totalorder %s43, %s44
      %p58 = scmp.eq.s32.totalorder %s22, 1
      %p59 = por %p57, %p58
      %p61 = scmp.ne.s32.totalorder %s44, %s60
      %p62 = scmp.eq.s32.totalorder %s22, 0
      %p63 = por %p61, %p62
      %s65 = sadd.s32 %s64, 1
      %p68 = scmp.eq.s32.totalorder %s16, 1
      %p69 = scmp.ne.s32.totalorder %s64, %s66
      %p70 = scmp.eq.s32.totalorder %s16, 0
      %p71 = por %p69, %p70
      %p72 = scmp.ne.s32.totalorder %s64, %s66
      %p73 = scmp.eq.s32.totalorder %s21, 1
      %p74 = por %p72, %p73
      %p75 = scmp.ne.s32.totalorder %s66, %s67
      %p76 = scmp.eq.s32.totalorder %s21, 0
      %p77 = por %p75, %p76
      %p78 = scmp.ne.s32.totalorder %s66, %s67
      %p79 = scmp.eq.s32.totalorder %s22, 1
      %p80 = por %p78, %p79
      %p82 = scmp.ne.s32.totalorder %s67, %s81
      %p83 = scmp.eq.s32.totalorder %s22, 0
      %p84 = por %p82, %p83
      %s85 = ssub.s32 %s23, %s35
      %s86 = ssub.s32 %s24, %s31
      %s87 = sor.u32 %s85, %s86
      %p88 = scmp.eq.s32.totalorder %s87, 0
      %s90 = sadd.s32 %s89, 1
      %s91 = scalar_select %p88, %s89, %s90
      %p94 = pneg %p88
      %p95 = scmp.eq.s32.totalorder %s16, 1
      %p96 = por %p94, %p95
      %p97 = scmp.ne.s32.totalorder %s89, %s92
      %p98 = scmp.eq.s32.totalorder %s16, 0
      %p99 = por %p97, %p98
      %p100 = scmp.ne.s32.totalorder %s89, %s92
      %p101 = scmp.eq.s32.totalorder %s21, 1
      %p102 = por %p100, %p101
      %p103 = scmp.ne.s32.totalorder %s92, %s93
      %p104 = scmp.eq.s32.totalorder %s21, 0
      %p105 = por %p103, %p104
      %p106 = scmp.ne.s32.totalorder %s92, %s93
      %p107 = scmp.eq.s32.totalorder %s22, 1
      %p108 = por %p106, %p107
      %p110 = scmp.ne.s32.totalorder %s93, %s109
      %p111 = scmp.eq.s32.totalorder %s22, 0
      %p112 = por %p110, %p111
      %s113 = ssub.s32 %s23, %s35
      %s114 = ssub.s32 %s24, %s31
      %s115 = sor.u32 %s113, %s114
      %p116 = scmp.eq.s32.totalorder %s115, 0
      %s118 = sadd.s32 %s117, 1
      %s119 = scalar_select %p116, %s117, %s118
      %p122 = pneg %p116
      %p123 = scmp.eq.s32.totalorder %s16, 1
      %p124 = por %p122, %p123
      %p125 = scmp.ne.s32.totalorder %s117, %s120
      %p126 = scmp.eq.s32.totalorder %s16, 0
      %p127 = por %p125, %p126
      %p128 = scmp.ne.s32.totalorder %s117, %s120
      %p129 = scmp.eq.s32.totalorder %s21, 1
      %p130 = por %p128, %p129
      %p131 = scmp.ne.s32.totalorder %s120, %s121
      %p132 = scmp.eq.s32.totalorder %s21, 0
      %p133 = por %p131, %p132
      %p134 = scmp.ne.s32.totalorder %s120, %s121
      %p135 = scmp.eq.s32.totalorder %s22, 1
      %p136 = por %p134, %p135
      %p138 = scmp.ne.s32.totalorder %s121, %s137
      %p139 = scmp.eq.s32.totalorder %s22, 0
      %p140 = por %p138, %p139
      %p141 = scmp.le.s32.totalorder 1, %s16
      %p142 = scmp.lt.s32.totalorder %s16, 3
      %p143 = pnand %p141, %p142
      %p144 = pneg %p143
      // Predicated region
      $region9: #{tpu_custom_call.1} parent=5 // pred_check
        _
      $region10: #{tpu_custom_call.1} parent=5 // pred_check_branch
        %146 = sbr.rel (%p143) target = $region12
      $region11: #{tpu_custom_call.1} parent=5 // pred_region
        %s147 = ssub.s32 %s16, 1
        // Predicated region
        $region13: #{tpu_custom_call.1} parent=11 // pred_check
          %p148 = pneg %p77
        $region14: #{tpu_custom_call.1} parent=11 // pred_check_branch
          %150 = sbr.rel (%p148) target = $region16
        $region15: #{tpu_custom_call.1} parent=11 // pred_region
          _
        $region16: #{tpu_custom_call.1} parent=11 // pred_fallthru
          _
      $region12: #{tpu_custom_call.1} parent=5 // pred_fallthru
        _
      %p151 = scmp.lt.s32.totalorder %s16, 2
      // Predicated region
      $region17: #{tpu_custom_call.1} parent=5 // pred_check
        %p152 = pneg %p151
      $region18: #{tpu_custom_call.1} parent=5 // pred_check_branch
        %154 = sbr.rel (%p152) target = $region20
      $region19: #{tpu_custom_call.1} parent=5 // pred_region
        // Predicated region
        $region21: #{tpu_custom_call.1} parent=19 // pred_check
          %p155 = pneg %p50
        $region22: #{tpu_custom_call.1} parent=19 // pred_check_branch
          %157 = sbr.rel (%p155) target = $region24
        $region23: #{tpu_custom_call.1} parent=19 // pred_region
          %p158 = scmp.lt.s32.totalorder %s23, 1
          %s159 = scalar_select %p158, %s23, 1
          %p160 = scmp.lt.s32.totalorder %s24, 0
          %s161 = scalar_select %p160, %s24, 0
          %s162 = sadd.s32 %s161, %s159
          %s163 = smul.addr %s162, 8
          %s164 = scalar_lea.vmem %s0, %s163
        $region24: #{tpu_custom_call.1} parent=19 // pred_fallthru
          _
      $region20: #{tpu_custom_call.1} parent=5 // pred_fallthru
        _
      %p165 = scmp.le.s32.totalorder 1, %s16
      %p166 = scmp.lt.s32.totalorder %s16, 3
      %p167 = pnand %p165, %p166
      %p168 = pneg %p167
      // Predicated region
      $region25: #{tpu_custom_call.1} parent=5 // pred_check
        _
      $region26: #{tpu_custom_call.1} parent=5 // pred_check_branch
        %170 = sbr.rel (%p167) target = $region28
      $region27: #{tpu_custom_call.1} parent=5 // pred_region
        %s171 = ssub.s32 %s16, 1
        %p172 = scmp.lt.s32.totalorder %s25, 1
        %s173 = scalar_select %p172, %s25, 1
        %p174 = scmp.lt.s32.totalorder %s26, 0
        %s175 = scalar_select %p174, %s26, 0
        %s176 = sadd.s32 %s175, %s173
        %s177 = smul.addr %s176, 8
        %s178 = scalar_lea.vmem %s0, %s177
        %p179 = pneg %p56
        %p180 = pneg %p53
        %p181 = pneg %p77
        %p182 = pneg %p74
        %p183 = pneg %p105
        %p184 = pneg %p102
        %s185 = sand.u32 %s92, 1
        %s186 = scalar_lea.sflag [#allocation3], %s185
        %s187 = sand.u32 %s92, 1
        %s188 = smul.addr %s187, 8
        %s189 = scalar_lea.vmem [#allocation2], %s188
        %p190 = pneg %p133
        %p191 = pneg %p130
        %s192 = sand.u32 %s120, 1
        %s193 = scalar_lea.sflag [#allocation5], %s192
        %s194 = sand.u32 %s120, 1
        %s195 = smul.addr %s194, 8
        %s196 = scalar_lea.vmem [#allocation4], %s195
        %p197 = scmp.lt.s32.totalorder %s25, 1
        %s198 = scalar_select %p197, %s25, 1
        %p199 = scmp.lt.s32.totalorder %s26, 0
        %s200 = scalar_select %p199, %s26, 0
        %s201 = sadd.s32 %s200, %s198
        %s202 = smul.addr %s201, 8
        %s203 = scalar_lea.vmem %s0, %s202
        %v204 = vld [vmem:[%s203] sm:$0xff]
        %v205 = vld [vmem:[%s1] sm:$0x1]
        %207 = vset.pattern.permute.xlu0 0
        %208 = vperm.xlu0 %207, %v204
        %v209 = vpop.permute.xlu0 %208
        %v212 = vperm.slane %v205, 0
        %v214 = vmul.f32 %v209, %v212
        %v215 = vand.u32 2147483647, %v214
        %vm216 = vcmp.le.f32.partialorder %v215, 0.7853982
        %vm217 = vcmp.lt.s32.totalorder %v214, 0
        %v218 = vand.u32 %v214, 2139095040
        %v219 = vshrl.u32 %v218, 23
        %v220 = vsub.s32 %v219, 127
        %v221 = vand.u32 2147483647, %v214
        %v222 = vand.u32 %v221, 8388607
        %v223 = vor.u32 %v222, 8388608
        %v224 = vsub.s32 0, %v223
        %v225 = vadd.s32 %v220, 1
        %vm226 = vcmp.gt.s32.totalorder %v225, 0
        %v227 = vsel %vm226, %v225, 0
        %v228 = vshrl.u32 %v227, 5
        %v229 = vand.u32 %v227, 31
        %v230 = vsub.s32 32, %v229
        %v231 = vshrl.u32 683565275, %v230
        %v232 = vshll.u32 683565275, %v229
        %v233 = vshrl.u32 2475754826, %v230
        %v234 = vor.u32 %v232, %v233
        %v235 = vshll.u32 2475754826, %v229
        %v236 = vshrl.u32 2131351028, %v230
        %v237 = vor.u32 %v235, %v236
        %v238 = vshll.u32 2131351028, %v229
        %v239 = vshrl.u32 2102212464, %v230
        %v240 = vor.u32 %v238, %v239
        %v241 = vshll.u32 2102212464, %v229
        %v242 = vshrl.u32 920167782, %v230
        %v243 = vor.u32 %v241, %v242
        %v244 = vshll.u32 920167782, %v229
        %v245 = vshrl.u32 1326507024, %v230
        %v246 = vor.u32 %v244, %v245
        %vm247 = vcmp.lt.s32.totalorder %v228, 1
        %vm248 = vcmp.lt.s32.totalorder %v228, 2
        %vm249 = vcmp.lt.s32.totalorder %v228, 3
        %vm250 = vcmp.lt.s32.totalorder %v228, 4
        %v251 = vsel %vm247, %v231, %v234
        %v252 = vsel %vm250, %v240, 2102212464
        %v253 = vsel %vm249, %v237, %v252
        %v254 = vsel %vm248, %v251, %v253
        %v255 = vsel %vm247, %v234, %v237
        %v256 = vsel %vm250, %v243, 920167782
        %v257 = vsel %vm249, %v240, %v256
        %v258 = vsel %vm248, %v255, %v257
        %v259 = vsel %vm247, %v237, %v240
        %v260 = vsel %vm250, %v246, 1326507024
        %v261 = vsel %vm249, %v243, %v260
        %v262 = vsel %vm248, %v259, %v261
        %v263 = vshll.u32 %v223, 8
        %v264 = vand.u32 %v263, 65535
        %v265 = vshrl.u32 %v263, 16
        %v266 = vand.u32 %v262, 65535
        %v267 = vshrl.u32 %v262, 16
        %v268 = vmul.u32 %v264, %v266
        %v269 = vmul.u32 %v264, %v267
        %v270 = vmul.u32 %v265, %v266
        %v271 = vmul.u32 %v265, %v267
        %v272 = vshll.u32 %v269, 16
        %v273 = vshrl.u32 %v269, 16
        %v274 = vshll.u32 %v270, 16
        %v275 = vshrl.u32 %v270, 16
        %vm276 = vc.u32 %v268, %v272
        %v277 = vsel %vm276, 1, 0
        %v278 = vadd.s32 %v268, %v272
        %v279 = vadd.s32 %v271, %v277
        %vm280 = vc.u32 %v278, %v274
        %v281 = vsel %vm280, 1, 0
        %v282 = vadd.s32 %v278, %v274
        %v283 = vadd.s32 %v279, %v281
        %v284 = vadd.s32 %v283, %v273
        %v285 = vadd.s32 %v284, %v275
        %v286 = vand.u32 %v263, 65535
        %v287 = vshrl.u32 %v263, 16
        %v288 = vand.u32 %v258, 65535
        %v289 = vshrl.u32 %v258, 16
        %v290 = vmul.u32 %v286, %v288
        %v291 = vmul.u32 %v286, %v289
        %v292 = vmul.u32 %v287, %v288
        %v293 = vmul.u32 %v287, %v289
        %v294 = vshll.u32 %v291, 16
        %v295 = vshrl.u32 %v291, 16
        %v296 = vshll.u32 %v292, 16
        %v297 = vshrl.u32 %v292, 16
        %vm298 = vc.u32 %v290, %v294
        %v299 = vsel %vm298, 1, 0
        %v300 = vadd.s32 %v290, %v294
        %v301 = vadd.s32 %v293, %v299
        %vm302 = vc.u32 %v300, %v296
        %v303 = vsel %vm302, 1, 0
        %v304 = vadd.s32 %v300, %v296
        %v305 = vadd.s32 %v301, %v303
        %v306 = vadd.s32 %v305, %v295
        %v307 = vadd.s32 %v306, %v297
        %v308 = vmul.u32 %v263, %v254
        %v309 = vadd.s32 %v285, %v304
        %vm310 = vc.u32 %v285, %v304
        %v311 = vadd.s32 %v307, 1
        %v312 = vsel %vm310, %v311, %v307
        %v313 = vadd.s32 %v308, %v312
        %v314 = vadd.s32 %v313, 536870912
        %v315 = vshrl.u32 %v314, 30
        %v316 = vshll.u32 %v315, 30
        %v317 = vsub.s32 %v313, %v316
        %vm318 = vcmp.lt.s32.totalorder %v317, 0
        %v319 = vsub.s32 0, %v317
        %v320 = vsel %vm318, %v319, %v317
        %v321 = vclz %v320
        %v322 = vsub.s32 %v321, 2
        %vm323 = vcmp.gt.s32.totalorder 0, %v322
        %v324 = vsel %vm323, 0, %v322
        %v325 = vsub.s32 32, %v324
        %v326 = vshll.u32 %v317, %v324
        %v327 = vshrl.u32 %v309, %v325
        %v328 = vor.u32 %v326, %v327
        %v329 = vsub.s32 4294967266, %v324
        %v330 = vadd.s32 %v329, 127
        %v331 = vshll.u32 %v330, 23
        %v332 = vor.u32 4788187, %v331
        %v333 = vand.u32 2147483647, %v332
        %v335 = vcvt.s32.f32 %v328
        %v336 = vmul.f32 %v335, %v333
        %v337 = vxor.u32 %v336, 2147483648
        %v338 = vsel %vm217, %v337, %v336
        %v339 = vsub.s32 4, %v315
        %v340 = vsel %vm217, %v339, %v315
        %v341 = vsel %vm216, %v214, %v338
        %v342 = vsel %vm216, 0, %v340
        %v343 = vmul.f32 %v341, %v341
        %v344 = vmul.f32 %v343, -0.001358992
        %v345 = vadd.f32 %v344, 0.041655596
        %v346 = vmul.f32 %v343, %v345
        %v347 = vadd.f32 %v346, -0.4999988
        %v348 = vmul.f32 %v343, %v347
        %v349 = vadd.f32 1.0, %v348
        %v350 = vmul.f32 %v341, %v341
        %v351 = vmul.f32 %v350, -0.00019511016
        %v352 = vadd.f32 %v351, 0.008332121
        %v353 = vmul.f32 %v350, %v352
        %v354 = vadd.f32 %v353, -0.16666654
        %v355 = vmul.f32 %v350, %v354
        %v356 = vadd.f32 %v355, 1.0
        %v357 = vmul.f32 %v356, %v341
        %vm358 = vweird.f32 %v214
        %v359 = vand.u32 %v342, 3
        %vm360 = vcmp.lt.s32.totalorder %v359, 2
        %vm361 = vcmp.eq.s32.totalorder %v359, 0
        %v362 = vxor.u32 %v357, 2147483648
        %v363 = vsel %vm361, %v349, %v362
        %vm364 = vcmp.eq.s32.totalorder %v359, 2
        %v365 = vxor.u32 %v349, 2147483648
        %v366 = vsel %vm364, %v365, %v357
        %v367 = vsel %vm360, %v363, %v366
        %v368 = vsel %vm358, nan, %v367
        %v369 = vand.u32 2147483647, %v214
        %vm370 = vcmp.le.f32.partialorder %v369, 0.7853982
        %vm371 = vcmp.lt.s32.totalorder %v214, 0
        %v372 = vand.u32 %v214, 2139095040
        %v373 = vshrl.u32 %v372, 23
        %v374 = vsub.s32 %v373, 127
        %v375 = vand.u32 2147483647, %v214
        %v376 = vand.u32 %v375, 8388607
        %v377 = vor.u32 %v376, 8388608
        %v378 = vsub.s32 0, %v377
        %v379 = vadd.s32 %v374, 1
        %vm380 = vcmp.gt.s32.totalorder %v379, 0
        %v381 = vsel %vm380, %v379, 0
        %v382 = vshrl.u32 %v381, 5
        %v383 = vand.u32 %v381, 31
        %v384 = vsub.s32 32, %v383
        %v385 = vshrl.u32 683565275, %v384
        %v386 = vshll.u32 683565275, %v383
        %v387 = vshrl.u32 2475754826, %v384
        %v388 = vor.u32 %v386, %v387
        %v389 = vshll.u32 2475754826, %v383
        %v390 = vshrl.u32 2131351028, %v384
        %v391 = vor.u32 %v389, %v390
        %v392 = vshll.u32 2131351028, %v383
        %v393 = vshrl.u32 2102212464, %v384
        %v394 = vor.u32 %v392, %v393
        %v395 = vshll.u32 2102212464, %v383
        %v396 = vshrl.u32 920167782, %v384
        %v397 = vor.u32 %v395, %v396
        %v398 = vshll.u32 920167782, %v383
        %v399 = vshrl.u32 1326507024, %v384
        %v400 = vor.u32 %v398, %v399
        %vm401 = vcmp.lt.s32.totalorder %v382, 1
        %vm402 = vcmp.lt.s32.totalorder %v382, 2
        %vm403 = vcmp.lt.s32.totalorder %v382, 3
        %vm404 = vcmp.lt.s32.totalorder %v382, 4
        %v405 = vsel %vm401, %v385, %v388
        %v406 = vsel %vm404, %v394, 2102212464
        %v407 = vsel %vm403, %v391, %v406
        %v408 = vsel %vm402, %v405, %v407
        %v409 = vsel %vm401, %v388, %v391
        %v410 = vsel %vm404, %v397, 920167782
        %v411 = vsel %vm403, %v394, %v410
        %v412 = vsel %vm402, %v409, %v411
        %v413 = vsel %vm401, %v391, %v394
        %v414 = vsel %vm404, %v400, 1326507024
        %v415 = vsel %vm403, %v397, %v414
        %v416 = vsel %vm402, %v413, %v415
        %v417 = vshll.u32 %v377, 8
        %v418 = vand.u32 %v417, 65535
        %v419 = vshrl.u32 %v417, 16
        %v420 = vand.u32 %v416, 65535
        %v421 = vshrl.u32 %v416, 16
        %v422 = vmul.u32 %v418, %v420
        %v423 = vmul.u32 %v418, %v421
        %v424 = vmul.u32 %v419, %v420
        %v425 = vmul.u32 %v419, %v421
        %v426 = vshll.u32 %v423, 16
        %v427 = vshrl.u32 %v423, 16
        %v428 = vshll.u32 %v424, 16
        %v429 = vshrl.u32 %v424, 16
        %vm430 = vc.u32 %v422, %v426
        %v431 = vsel %vm430, 1, 0
        %v432 = vadd.s32 %v422, %v426
        %v433 = vadd.s32 %v425, %v431
        %vm434 = vc.u32 %v432, %v428
        %v435 = vsel %vm434, 1, 0
        %v436 = vadd.s32 %v432, %v428
        %v437 = vadd.s32 %v433, %v435
        %v438 = vadd.s32 %v437, %v427
        %v439 = vadd.s32 %v438, %v429
        %v440 = vand.u32 %v417, 65535
        %v441 = vshrl.u32 %v417, 16
        %v442 = vand.u32 %v412, 65535
        %v443 = vshrl.u32 %v412, 16
        %v444 = vmul.u32 %v440, %v442
        %v445 = vmul.u32 %v440, %v443
        %v446 = vmul.u32 %v441, %v442
        %v447 = vmul.u32 %v441, %v443
        %v448 = vshll.u32 %v445, 16
        %v449 = vshrl.u32 %v445, 16
        %v450 = vshll.u32 %v446, 16
        %v451 = vshrl.u32 %v446, 16
        %vm452 = vc.u32 %v444, %v448
        %v453 = vsel %vm452, 1, 0
        %v454 = vadd.s32 %v444, %v448
        %v455 = vadd.s32 %v447, %v453
        %vm456 = vc.u32 %v454, %v450
        %v457 = vsel %vm456, 1, 0
        %v458 = vadd.s32 %v454, %v450
        %v459 = vadd.s32 %v455, %v457
        %v460 = vadd.s32 %v459, %v449
        %v461 = vadd.s32 %v460, %v451
        %v462 = vmul.u32 %v417, %v408
        %v463 = vadd.s32 %v439, %v458
        %vm464 = vc.u32 %v439, %v458
        %v465 = vadd.s32 %v461, 1
        %v466 = vsel %vm464, %v465, %v461
        %v467 = vadd.s32 %v462, %v466
        %v468 = vadd.s32 %v467, 536870912
        %v469 = vshrl.u32 %v468, 30
        %v470 = vshll.u32 %v469, 30
        %v471 = vsub.s32 %v467, %v470
        %vm472 = vcmp.lt.s32.totalorder %v471, 0
        %v473 = vsub.s32 0, %v471
        %v474 = vsel %vm472, %v473, %v471
        %v475 = vclz %v474
        %v476 = vsub.s32 %v475, 2
        %vm477 = vcmp.gt.s32.totalorder 0, %v476
        %v478 = vsel %vm477, 0, %v476
        %v479 = vsub.s32 32, %v478
        %v480 = vshll.u32 %v471, %v478
        %v481 = vshrl.u32 %v463, %v479
        %v482 = vor.u32 %v480, %v481
        %v483 = vsub.s32 4294967266, %v478
        %v484 = vadd.s32 %v483, 127
        %v485 = vshll.u32 %v484, 23
        %v486 = vor.u32 4788187, %v485
        %v487 = vand.u32 2147483647, %v486
        %v489 = vcvt.s32.f32 %v482
        %v490 = vmul.f32 %v489, %v487
        %v491 = vxor.u32 %v490, 2147483648
        %v492 = vsel %vm371, %v491, %v490
        %v493 = vsub.s32 4, %v469
        %v494 = vsel %vm371, %v493, %v469
        %v495 = vsel %vm370, %v214, %v492
        %v496 = vsel %vm370, 0, %v494
        %v497 = vmul.f32 %v495, %v495
        %v498 = vmul.f32 %v497, -0.001358992
        %v499 = vadd.f32 %v498, 0.041655596
        %v500 = vmul.f32 %v497, %v499
        %v501 = vadd.f32 %v500, -0.4999988
        %v502 = vmul.f32 %v497, %v501
        %v503 = vadd.f32 1.0, %v502
        %v504 = vmul.f32 %v495, %v495
        %v505 = vmul.f32 %v504, -0.00019511016
        %v506 = vadd.f32 %v505, 0.008332121
        %v507 = vmul.f32 %v504, %v506
        %v508 = vadd.f32 %v507, -0.16666654
        %v509 = vmul.f32 %v504, %v508
        %v510 = vadd.f32 %v509, 1.0
        %v511 = vmul.f32 %v510, %v495
        %vm512 = vweird.f32 %v214
        %v513 = vadd.s32 %v496, 3
        %v514 = vand.u32 %v513, 3
        %vm515 = vcmp.lt.s32.totalorder %v514, 2
        %vm516 = vcmp.eq.s32.totalorder %v514, 0
        %v517 = vxor.u32 %v511, 2147483648
        %v518 = vsel %vm516, %v503, %v517
        %vm519 = vcmp.eq.s32.totalorder %v514, 2
        %v520 = vxor.u32 %v503, 2147483648
        %v521 = vsel %vm519, %v520, %v511
        %v522 = vsel %vm515, %v518, %v521
        %v523 = vsel %vm512, nan, %v522
        %525 = vrot.lane.b32.xlu0 %v368, 16
        %v526 = vpop.permute.xlu0 %525
        %vm528 = vcmask 130048
        %v529 = vsel %vm528, %v368, %v526
        %vm530 = vcmask 261120
        %531 = vst.msk [vmem:[%s189] sm:$0xff] %vm530, %v529
        %533 = vrot.lane.b32.xlu0 %v523, 16
        %v534 = vpop.permute.xlu0 %533
        %v536 = vsel %vm528, %v523, %v534
        %537 = vst.msk [vmem:[%s196] sm:$0xff] %vm530, %v536
        %s538 = sand.u32 %s92, 1
        %s539 = scalar_lea.sflag [#allocation3], %s538
        %s540 = sand.u32 %s92, 1
        %s541 = smul.addr %s540, 8
        %s542 = scalar_lea.vmem [#allocation2], %s541
        %s543 = sand.u32 %s120, 1
        %s544 = scalar_lea.sflag [#allocation5], %s543
        %s545 = sand.u32 %s120, 1
        %s546 = smul.addr %s545, 8
        %s547 = scalar_lea.vmem [#allocation4], %s546
        // Predicated region
        $region29: #{tpu_custom_call.1} parent=27 // pred_check
          %p548 = pneg %p102
        $region30: #{tpu_custom_call.1} parent=27 // pred_check_branch
          %550 = sbr.rel (%p548) target = $region32
        $region31: #{tpu_custom_call.1} parent=27 // pred_region
          %552 = vsyncadd %s539, 0
          %s553 = sadd.s32 %s26, %s25
          %s554 = smul.addr %s553, 8
          %s555 = scalar_lea.hbm %s2, %s554
          %s557 = sshll.u32 %s542, 4
          %s558 = int_to_ptr.vmem [resolvable:$true] %s557
          %s559 = sshll.u32 %s555, 4
          %s560 = int_to_ptr.hbm [resolvable:$true] %s559
          %562 = dma.vmem_to_hbm [thread:$0]  %s558, 128, %s560, %s539
        $region32: #{tpu_custom_call.1} parent=27 // pred_fallthru
          _
        // Predicated region
        $region33: #{tpu_custom_call.1} parent=27 // pred_check
          %p563 = pneg %p130
        $region34: #{tpu_custom_call.1} parent=27 // pred_check_branch
          %565 = sbr.rel (%p563) target = $region36
        $region35: #{tpu_custom_call.1} parent=27 // pred_region
          %567 = vsyncadd %s544, 0
          %s568 = sadd.s32 %s26, %s25
          %s569 = smul.addr %s568, 8
          %s570 = scalar_lea.hbm %s3, %s569
          %s572 = sshll.u32 %s547, 4
          %s573 = int_to_ptr.vmem [resolvable:$true] %s572
          %s574 = sshll.u32 %s570, 4
          %s575 = int_to_ptr.hbm [resolvable:$true] %s574
          %577 = dma.vmem_to_hbm [thread:$0]  %s573, 128, %s575, %s544
        $region36: #{tpu_custom_call.1} parent=27 // pred_fallthru
          _
      $region28: #{tpu_custom_call.1} parent=5 // pred_fallthru
        _
      %p578 = scmp.le.s32.totalorder 2, %s16
      // Predicated region
      $region37: #{tpu_custom_call.1} parent=5 // pred_check
        %p579 = pneg %p578
      $region38: #{tpu_custom_call.1} parent=5 // pred_check_branch
        %581 = sbr.rel (%p579) target = $region40
      $region39: #{tpu_custom_call.1} parent=5 // pred_region
        %s582 = ssub.s32 %s16, 2
        // Predicated region
        $region41: #{tpu_custom_call.1} parent=39 // pred_check
          %p583 = pneg %p108
        $region42: #{tpu_custom_call.1} parent=39 // pred_check_branch
          %585 = sbr.rel (%p583) target = $region44
        $region43: #{tpu_custom_call.1} parent=39 // pred_region
          %s586 = sand.u32 %s93, 1
          %s587 = scalar_lea.sflag [#allocation3], %s586
          %s588 = sand.u32 %s93, 1
          %s589 = smul.addr %s588, 8
          %s590 = scalar_lea.vmem [#allocation2], %s589
          %592 = dma.done %s587, 128
        $region44: #{tpu_custom_call.1} parent=39 // pred_fallthru
          _
        // Predicated region
        $region45: #{tpu_custom_call.1} parent=39 // pred_check
          %p593 = pneg %p136
        $region46: #{tpu_custom_call.1} parent=39 // pred_check_branch
          %595 = sbr.rel (%p593) target = $region48
        $region47: #{tpu_custom_call.1} parent=39 // pred_region
          %s596 = sand.u32 %s121, 1
          %s597 = scalar_lea.sflag [#allocation5], %s596
          %s598 = sand.u32 %s121, 1
          %s599 = smul.addr %s598, 8
          %s600 = scalar_lea.vmem [#allocation4], %s599
          %602 = dma.done %s597, 128
        $region48: #{tpu_custom_call.1} parent=39 // pred_fallthru
          _
      $region40: #{tpu_custom_call.1} parent=5 // pred_fallthru
        _
    $region6: #{tpu_custom_call.1} parent=1 // loop_footer
      %s20 = sadd.s32 1, %s16
    $region7: #{tpu_custom_call.1} parent=1 // loop_footer_branch
      %15 = sbr.rel target = $region3
    $region8: #{tpu_custom_call.1} parent=1 // loop_exit
      _
    %603 = vsyncpa [#allocation3], 1
    %s604 = scalar_lea.sflag [#allocation3], 1
    %605 = vsyncpa %s604, 1
    %606 = vsyncpa [#allocation5], 1
    %s607 = scalar_lea.sflag [#allocation5], 1
    %608 = vsyncpa %s607, 1

</llo_original>
